<compile_context>
chip_gen: v7x
topology: tpu7x:2x2x1
jax: 0.10.0
libtpu: 0.0.40
codegen_flags: <defaults>
</compile_context>

<pallas_src>
import functools
import math

import jax
import jax.numpy as jnp
from jax.experimental import pallas as pl
from jax.experimental.pallas import tpu as pltpu


def _round_up(x, m):
    return ((x + m - 1) // m) * m


# ---------------------------------------------------------------------------
# Kernel
# ---------------------------------------------------------------------------
def _fused_mlp_kernel(*refs, num_layers, compute_dtype):
    # refs = (x_ref, w0, b0, w1, b1, ..., w_{L-1}, b_{L-1}, o_ref)
    x_ref = refs[0]
    o_ref = refs[-1]
    h = x_ref[...]                                   # f32 activations
    for l in range(num_layers):
        w_ref = refs[1 + 2 * l]                      # bf16 weight (VMEM resident)
        b_ref = refs[2 + 2 * l]                      # f32 bias
        # bf16 x bf16 -> f32 accumulation on the MXU.
        h = jnp.dot(h.astype(compute_dtype), w_ref[...],
                    preferred_element_type=jnp.float32)
        h = h + b_ref[...]                           # f32 epilogue (VPU)
        if l < num_layers - 1:                       # ReLU on all but the last layer
            h = jnp.maximum(h, 0.0)
    o_ref[...] = h.astype(o_ref.dtype)


# ---------------------------------------------------------------------------
# One-time capability probe: single-buffered (Buffered(1)) constant-index blocks.
# ---------------------------------------------------------------------------
_SINGLE_BUFFER_OK = None


def _single_buffer_weights_supported():
    global _SINGLE_BUFFER_OK
    if _SINGLE_BUFFER_OK is not None:
        return _SINGLE_BUFFER_OK
    try:
        def _probe_kernel(a_ref, w_ref, o_ref):
            o_ref[...] = a_ref[...] + w_ref[...]

        f = pl.pallas_call(
            _probe_kernel,
            out_shape=jax.ShapeDtypeStruct((16, 128), jnp.float32),
            grid=(2,),
            in_specs=[pl.BlockSpec((8, 128), lambda i: (i, 0)),
                      pl.BlockSpec((8, 128), lambda i: (0, 0),
                                   pipeline_mode=pl.Buffered(1))],
            out_specs=pl.BlockSpec((8, 128), lambda i: (i, 0)),
        )
        jax.block_until_ready(f(jnp.zeros((16, 128), jnp.float32),
                                jnp.ones((8, 128), jnp.float32)))
        _SINGLE_BUFFER_OK = True
    except Exception:
        _SINGLE_BUFFER_OK = False   # fall back to default double buffering
    return _SINGLE_BUFFER_OK


# ---------------------------------------------------------------------------
# Build-time parameter padding (done ONCE, not per forward call)
# ---------------------------------------------------------------------------
def _pad_params(params, compute_dtype=jnp.bfloat16, lane_multiple=128):
    """Zero-pad each [Din, Dout] weight / [Dout] bias to lane multiples.

    Weights are stored in the MXU compute dtype (bf16); biases stay f32 for the
    f32 epilogue.  Zero padding keeps the math exact (padded cols -> 0, ReLU(0)=0,
    padded rows contribute 0 to the next layer).
    """
    padded = []
    for (w_t, b) in params:
        din, dout = w_t.shape
        din_p = _round_up(din, lane_multiple)
        dout_p = _round_up(dout, lane_multiple)
        w_p = jnp.zeros((din_p, dout_p), compute_dtype).at[:din, :dout].set(
            w_t.astype(compute_dtype))
        b_p = jnp.zeros((1, dout_p), jnp.float32).at[0, :dout].set(
            b.astype(jnp.float32))
        padded.append((w_p, b_p))
    return padded


def _choose_tb(b_pad, max_tb=512):
    """Largest multiple-of-16 divisor of b_pad that is <= max_tb, preferring
    >= 2 grid steps (so v7x's two TensorCores both get work)."""
    cap = max_tb
    if b_pad >= 32:                      # can afford >= 2 grid steps
        cap = min(cap, b_pad // 2)
    cap = min(cap, b_pad)
    best = 16
    for d in range(16, cap + 1, 16):
        if b_pad % d == 0:
            best = d
    return best


def _vmem_limit_bytes(tb, padded_params, din_pad, dout_pad, single_buffer_weights):
    wbuf = 1 if single_buffer_weights else 2
    total = 0
    for (w_p, b_p) in padded_params:
        total += w_p.size * w_p.dtype.itemsize * wbuf
        total += b_p.size * b_p.dtype.itemsize * wbuf
    total += 2 * tb * din_pad * 4            # x block, double buffered (f32)
    total += 2 * tb * dout_pad * 4           # out block, double buffered (f32)
    max_dim = max([din_pad] + [w.shape[1] for (w, _) in padded_params])
    total += 4 * tb * max_dim * 4            # live intermediate activation headroom
    total = int(total * 1.25) + (2 << 20)    # ~25% + 2 MiB slack for internal scratch
    return max(32 << 20, min(total, 100 << 20))


# ---------------------------------------------------------------------------
# Single fused pallas_call (whole MLP, weights VMEM-resident)
# ---------------------------------------------------------------------------
def _fused_feedforward(padded_params, x_padded, *, tb, single_buffer_weights,
                       true_batch, true_dims, compute_dtype):
    num_layers = len(padded_params)
    b_pad, din_pad = x_padded.shape
    dout_pad = padded_params[-1][0].shape[1]
    grid = (b_pad // tb,)

    weight_kw = {}
    if single_buffer_weights:
        weight_kw = dict(pipeline_mode=pl.Buffered(1))

    in_specs = [pl.BlockSpec((tb, din_pad), lambda i: (i, 0))]
    flat_inputs = [x_padded]
    for (w_p, b_p) in padded_params:
        # Constant block index -> fetched once, reused across every batch tile.
        in_specs.append(pl.BlockSpec(w_p.shape, lambda i: (0, 0), **weight_kw))
        in_specs.append(pl.BlockSpec(b_p.shape, lambda i: (0, 0), **weight_kw))
        flat_inputs.append(w_p)
        flat_inputs.append(b_p)

    # Cost estimate from the TRUE (unpadded) problem, not the 128-padded shapes.
    w_itemsize = jnp.dtype(compute_dtype).itemsize
    flops = sum(2 * true_batch * di * do for (di, do) in true_dims)
    bytes_accessed = (true_batch * true_dims[0][0] * 4
                      + sum(di * do * w_itemsize + do * 4 for (di, do) in true_dims)
                      + true_batch * true_dims[-1][1] * 4)

    vmem_limit = _vmem_limit_bytes(tb, padded_params, din_pad, dout_pad,
                                   single_buffer_weights)

    kernel = functools.partial(_fused_mlp_kernel, num_layers=num_layers,
                               compute_dtype=compute_dtype)
    return pl.pallas_call(
        kernel,
        out_shape=jax.ShapeDtypeStruct((b_pad, dout_pad), jnp.float32),
        grid=grid,
        in_specs=in_specs,
        out_specs=pl.BlockSpec((tb, dout_pad), lambda i: (i, 0)),
        compiler_params=pltpu.CompilerParams(
            dimension_semantics=("parallel",),
            vmem_limit_bytes=vmem_limit),
        cost_estimate=pl.CostEstimate(
            flops=flops, transcendentals=0, bytes_accessed=bytes_accessed),
    )(*flat_inputs)


# ---------------------------------------------------------------------------
# User-facing builder: pad/cast weights ONCE, return a jitted forward fn.
# ---------------------------------------------------------------------------
def make_feedforward(params, compute_dtype=jnp.bfloat16, max_batch_tile=512):
    padded_params = _pad_params(params, compute_dtype)
    true_dims = tuple((int(w.shape[0]), int(w.shape[1])) for (w, _) in params)
    din, dout = true_dims[0][0], true_dims[-1][1]
    din_pad = padded_params[0][0].shape[0]
    single_buffer = _single_buffer_weights_supported()

    def forward(padded, x):
        b = x.shape[0]
        # Pad batch only to a multiple of 16 (bf16 sublane packing) -- no 2x blow-up.
        b_pad = _round_up(max(b, 16), 16)
        tb = _choose_tb(b_pad, max_batch_tile)
        x_p = jnp.zeros((b_pad, din_pad), jnp.float32).at[:b, :din].set(
            x.astype(jnp.float32))
        out_p = _fused_feedforward(
            padded, x_p, tb=tb, single_buffer_weights=single_buffer,
            true_batch=b, true_dims=true_dims, compute_dtype=compute_dtype)
        # Padded rows/cols are sliced away here; never expose them to consumers.
        return out_p[:b, :dout]

    jitted = jax.jit(forward)
    return lambda x: jitted(padded_params, x)


# ---------------------------------------------------------------------------
# Init + references
# ---------------------------------------------------------------------------
def init_feedforward_params(key, input_dim, n_layers, model_dim,
                            final_layers, output_dim):
    """Deterministic init mirroring nn.Linear default U(-1/sqrt(fan_in), +)."""
    dims = [input_dim]
    for _ in range(n_layers):
        dims.append(model_dim)
    if isinstance(final_layers, list):
        for h in final_layers:
            dims.append(h)
    elif isinstance(final_layers, int):
        dims.append(final_layers)
    else:
        raise ValueError(f"final_layers must be list or int, got {type(final_layers)}")
    dims.append(output_dim)

    params = []
    for i in range(len(dims) - 1):
        fan_in, fan_out = dims[i], dims[i + 1]
        key, kw, kb = jax.random.split(key, 3)
        bound = 1.0 / math.sqrt(fan_in)
        # Stored already transposed: [fan_in, fan_out] so kernel does x @ W_t + b.
        w_t = jax.random.uniform(kw, (fan_in, fan_out), jnp.float32,
                                 minval=-bound, maxval=bound)
        b = jax.random.uniform(kb, (fan_out,), jnp.float32,
                               minval=-bound, maxval=bound)
        params.append((w_t, b))
    return params


def feedforward_reference_f32(params, x):
    h = x
    for (w_t, b) in params[:-1]:
        h = jnp.maximum(h @ w_t + b, 0.0)
    w_t, b = params[-1]
    return h @ w_t + b


def feedforward_reference_matched(params, x, compute_dtype):
    """Same numerics as the kernel: bf16 matmul operands, f32 accumulation/epilogue."""
    h = x.astype(jnp.float32)
    for idx, (w_t, b) in enumerate(params):
        h = jnp.dot(h.astype(compute_dtype), w_t.astype(compute_dtype),
                    preferred_element_type=jnp.float32) + b.astype(jnp.float32)
        if idx < len(params) - 1:
            h = jnp.maximum(h, 0.0)
    return h


if __name__ == "__main__":
    # FeedForward(input_dim=16, n_layers=2, model_dim=32,
    #             final_layers=[24], output_dim=8), batch=8
    input_dim, n_layers, model_dim, final_layers, output_dim = 16, 2, 32, [24], 8
    batch = 8

    key = jax.random.PRNGKey(0)
    key, kx = jax.random.split(key)
    x = jax.random.normal(kx, (batch, input_dim), jnp.float32)

    params = init_feedforward_params(key, input_dim, n_layers, model_dim,
                                     final_layers, output_dim)

    # Pads/casts the weights ONCE and returns a jitted (pad -> kernel -> slice) fn.
    forward = make_feedforward(params, compute_dtype=jnp.bfloat16)

    out = jax.block_until_ready(forward(x))
    assert out.shape == (batch, output_dim)

    # Bit-accurate check vs. a reference using identical bf16-matmul / f32-epilogue math.
    ref_matched = feedforward_reference_matched(params, x, jnp.bfloat16)
    assert jnp.allclose(out, ref_matched, atol=1e-4, rtol=1e-4), \
        float(jnp.max(jnp.abs(out - ref_matched)))

    # Loose check vs. the pure-f32 module semantics (bf16 MXU rounding only).
    ref_f32 = feedforward_reference_f32(params, x)
    assert jnp.allclose(out, ref_f32, atol=5e-2, rtol=5e-2), \
        float(jnp.max(jnp.abs(out - ref_f32)))

    print("KERNEL_OK")
</pallas_src>

<mosaic_0001>
module attributes {stable_mosaic.version = 11 : i64} {
  func.func @_probe_kernel(%arg0: i32, %arg1: memref<8x128xf32, #tpu.memory_space<vmem>>, %arg2: memref<8x128xf32, #tpu.memory_space<vmem>>, %arg3: memref<8x128xf32, #tpu.memory_space<vmem>>) attributes {dimension_semantics = [#tpu.dimension_semantics<arbitrary>], iteration_bounds = array<i64: 2>, scalar_prefetch = 0 : i64, scratch_operands = 0 : i64, tpu.core_type = #tpu.core_type<tc>, window_params = [{transform_indices = @transform_0, window_bounds = array<i64: 8, 128>}, {pipeline_mode = #tpu.pipeline_mode<synchronous>, transform_indices = @transform_1, window_bounds = array<i64: 8, 128>}, {transform_indices = @transform_2, window_bounds = array<i64: 8, 128>}]} {
    %c0 = arith.constant 0 : index
    %c0_0 = arith.constant 0 : index
    %0 = vector.load %arg1[%c0, %c0_0] : memref<8x128xf32, #tpu.memory_space<vmem>>, vector<8x128xf32>
    %c0_1 = arith.constant 0 : index
    %c0_2 = arith.constant 0 : index
    %1 = vector.load %arg2[%c0_1, %c0_2] : memref<8x128xf32, #tpu.memory_space<vmem>>, vector<8x128xf32>
    %2 = arith.addf %0, %1 : vector<8x128xf32>
    %c0_3 = arith.constant 0 : index
    %c0_4 = arith.constant 0 : index
    %3 = vector.load %arg3[%c0_3, %c0_4] : memref<8x128xf32, #tpu.memory_space<vmem>>, vector<8x128xf32>
    tpu.vector_store %arg3[%c0_3, %c0_4], %2 {strides = array<i32>} : memref<8x128xf32, #tpu.memory_space<vmem>>, vector<8x128xf32>,
    return
  }
  func.func @transform_0(%arg0: i32) -> (i32, i32) {
    %c0_i32 = arith.constant 0 : i32
    %c0_i32_0 = arith.constant 0 : i32
    return %arg0, %c0_i32 : i32, i32
  }
  func.func @transform_1(%arg0: i32) -> (i32, i32) {
    %c0_i32 = arith.constant 0 : i32
    %c0_i32_0 = arith.constant 0 : i32
    %c0_i32_1 = arith.constant 0 : i32
    return %c0_i32, %c0_i32_0 : i32, i32
  }
  func.func @transform_2(%arg0: i32) -> (i32, i32) {
    %c0_i32 = arith.constant 0 : i32
    %c0_i32_0 = arith.constant 0 : i32
    return %arg0, %c0_i32 : i32, i32
  }
}

module attributes {stable_mosaic.version = 11 : i64} {
  func.func @_fused_mlp_kernel(%arg0: i32, %arg1: memref<16x128xf32, #tpu.memory_space<vmem>>, %arg2: memref<128x128xbf16, #tpu.memory_space<vmem>>, %arg3: memref<1x128xf32, #tpu.memory_space<vmem>>, %arg4: memref<128x128xbf16, #tpu.memory_space<vmem>>, %arg5: memref<1x128xf32, #tpu.memory_space<vmem>>, %arg6: memref<128x128xbf16, #tpu.memory_space<vmem>>, %arg7: memref<1x128xf32, #tpu.memory_space<vmem>>, %arg8: memref<128x128xbf16, #tpu.memory_space<vmem>>, %arg9: memref<1x128xf32, #tpu.memory_space<vmem>>, %arg10: memref<16x128xf32, #tpu.memory_space<vmem>>) attributes {dimension_semantics = [#tpu.dimension_semantics<parallel>], iteration_bounds = array<i64: 1>, scalar_prefetch = 0 : i64, scratch_operands = 0 : i64, tpu.core_type = #tpu.core_type<tc>, window_params = [{transform_indices = @transform_0, window_bounds = array<i64: 16, 128>}, {pipeline_mode = #tpu.pipeline_mode<synchronous>, transform_indices = @transform_1, window_bounds = array<i64: 128, 128>}, {pipeline_mode = #tpu.pipeline_mode<synchronous>, transform_indices = @transform_2, window_bounds = array<i64: 1, 128>}, {pipeline_mode = #tpu.pipeline_mode<synchronous>, transform_indices = @transform_3, window_bounds = array<i64: 128, 128>}, {pipeline_mode = #tpu.pipeline_mode<synchronous>, transform_indices = @transform_4, window_bounds = array<i64: 1, 128>}, {pipeline_mode = #tpu.pipeline_mode<synchronous>, transform_indices = @transform_5, window_bounds = array<i64: 128, 128>}, {pipeline_mode = #tpu.pipeline_mode<synchronous>, transform_indices = @transform_6, window_bounds = array<i64: 1, 128>}, {pipeline_mode = #tpu.pipeline_mode<synchronous>, transform_indices = @transform_7, window_bounds = array<i64: 128, 128>}, {pipeline_mode = #tpu.pipeline_mode<synchronous>, transform_indices = @transform_8, window_bounds = array<i64: 1, 128>}, {transform_indices = @transform_9, window_bounds = array<i64: 16, 128>}]} {
    %c0 = arith.constant 0 : index
    %c0_0 = arith.constant 0 : index
    %0 = vector.load %arg1[%c0, %c0_0] : memref<16x128xf32, #tpu.memory_space<vmem>>, vector<16x128xf32>
    %1 = arith.truncf %0 : vector<16x128xf32> to vector<16x128xbf16>
    %c0_1 = arith.constant 0 : index
    %c0_2 = arith.constant 0 : index
    %2 = vector.load %arg2[%c0_1, %c0_2] : memref<128x128xbf16, #tpu.memory_space<vmem>>, vector<128x128xbf16>
    %cst = arith.constant dense<0.000000e+00> : vector<16x128xf32>
    %3 = tpu.matmul %1, %2, %cst {dimension_numbers = #tpu.dot_dimension_numbers<[1], [0], [0], [1], [0, 0, 1, 1], [], []>} : vector<16x128xbf16>, vector<128x128xbf16>, vector<16x128xf32> -> vector<16x128xf32>
    %c0_3 = arith.constant 0 : index
    %c0_4 = arith.constant 0 : index
    %4 = vector.load %arg3[%c0_3, %c0_4] : memref<1x128xf32, #tpu.memory_space<vmem>>, vector<1x128xf32>
    %5 = vector.broadcast %4 : vector<1x128xf32> to vector<16x128xf32>
    %6 = arith.addf %3, %5 : vector<16x128xf32>
    %cst_5 = arith.constant 0.000000e+00 : f32
    %7 = vector.broadcast %cst_5 : f32 to vector<16x128xf32>
    %8 = arith.maximumf %6, %7 : vector<16x128xf32>
    %9 = arith.truncf %8 : vector<16x128xf32> to vector<16x128xbf16>
    %c0_6 = arith.constant 0 : index
    %c0_7 = arith.constant 0 : index
    %10 = vector.load %arg4[%c0_6, %c0_7] : memref<128x128xbf16, #tpu.memory_space<vmem>>, vector<128x128xbf16>
    %cst_8 = arith.constant dense<0.000000e+00> : vector<16x128xf32>
    %11 = tpu.matmul %9, %10, %cst_8 {dimension_numbers = #tpu.dot_dimension_numbers<[1], [0], [0], [1], [0, 0, 1, 1], [], []>} : vector<16x128xbf16>, vector<128x128xbf16>, vector<16x128xf32> -> vector<16x128xf32>
    %c0_9 = arith.constant 0 : index
    %c0_10 = arith.constant 0 : index
    %12 = vector.load %arg5[%c0_9, %c0_10] : memref<1x128xf32, #tpu.memory_space<vmem>>, vector<1x128xf32>
    %13 = vector.broadcast %12 : vector<1x128xf32> to vector<16x128xf32>
    %14 = arith.addf %11, %13 : vector<16x128xf32>
    %cst_11 = arith.constant 0.000000e+00 : f32
    %15 = vector.broadcast %cst_11 : f32 to vector<16x128xf32>
    %16 = arith.maximumf %14, %15 : vector<16x128xf32>
    %17 = arith.truncf %16 : vector<16x128xf32> to vector<16x128xbf16>
    %c0_12 = arith.constant 0 : index
    %c0_13 = arith.constant 0 : index
    %18 = vector.load %arg6[%c0_12, %c0_13] : memref<128x128xbf16, #tpu.memory_space<vmem>>, vector<128x128xbf16>
    %cst_14 = arith.constant dense<0.000000e+00> : vector<16x128xf32>
    %19 = tpu.matmul %17, %18, %cst_14 {dimension_numbers = #tpu.dot_dimension_numbers<[1], [0], [0], [1], [0, 0, 1, 1], [], []>} : vector<16x128xbf16>, vector<128x128xbf16>, vector<16x128xf32> -> vector<16x128xf32>
    %c0_15 = arith.constant 0 : index
    %c0_16 = arith.constant 0 : index
    %20 = vector.load %arg7[%c0_15, %c0_16] : memref<1x128xf32, #tpu.memory_space<vmem>>, vector<1x128xf32>
    %21 = vector.broadcast %20 : vector<1x128xf32> to vector<16x128xf32>
    %22 = arith.addf %19, %21 : vector<16x128xf32>
    %cst_17 = arith.constant 0.000000e+00 : f32
    %23 = vector.broadcast %cst_17 : f32 to vector<16x128xf32>
    %24 = arith.maximumf %22, %23 : vector<16x128xf32>
    %25 = arith.truncf %24 : vector<16x128xf32> to vector<16x128xbf16>
    %c0_18 = arith.constant 0 : index
    %c0_19 = arith.constant 0 : index
    %26 = vector.load %arg8[%c0_18, %c0_19] : memref<128x128xbf16, #tpu.memory_space<vmem>>, vector<128x128xbf16>
    %cst_20 = arith.constant dense<0.000000e+00> : vector<16x128xf32>
    %27 = tpu.matmul %25, %26, %cst_20 {dimension_numbers = #tpu.dot_dimension_numbers<[1], [0], [0], [1], [0, 0, 1, 1], [], []>} : vector<16x128xbf16>, vector<128x128xbf16>, vector<16x128xf32> -> vector<16x128xf32>
    %c0_21 = arith.constant 0 : index
    %c0_22 = arith.constant 0 : index
    %28 = vector.load %arg9[%c0_21, %c0_22] : memref<1x128xf32, #tpu.memory_space<vmem>>, vector<1x128xf32>
    %29 = vector.broadcast %28 : vector<1x128xf32> to vector<16x128xf32>
    %30 = arith.addf %27, %29 : vector<16x128xf32>
    %c0_23 = arith.constant 0 : index
    %c0_24 = arith.constant 0 : index
    %31 = vector.load %arg10[%c0_23, %c0_24] : memref<16x128xf32, #tpu.memory_space<vmem>>, vector<16x128xf32>
    tpu.vector_store %arg10[%c0_23, %c0_24], %30 {strides = array<i32>} : memref<16x128xf32, #tpu.memory_space<vmem>>, vector<16x128xf32>,
    return
  }
  func.func @transform_0(%arg0: i32) -> (i32, i32) {
    %c0_i32 = arith.constant 0 : i32
    %c0_i32_0 = arith.constant 0 : i32
    return %arg0, %c0_i32 : i32, i32
  }
  func.func @transform_1(%arg0: i32) -> (i32, i32) {
    %c0_i32 = arith.constant 0 : i32
    %c0_i32_0 = arith.constant 0 : i32
    %c0_i32_1 = arith.constant 0 : i32
    return %c0_i32, %c0_i32_0 : i32, i32
  }
  func.func @transform_2(%arg0: i32) -> (i32, i32) {
    %c0_i32 = arith.constant 0 : i32
    %c0_i32_0 = arith.constant 0 : i32
    %c0_i32_1 = arith.constant 0 : i32
    return %c0_i32, %c0_i32_0 : i32, i32
  }
  func.func @transform_3(%arg0: i32) -> (i32, i32) {
    %c0_i32 = arith.constant 0 : i32
    %c0_i32_0 = arith.constant 0 : i32
    %c0_i32_1 = arith.constant 0 : i32
    return %c0_i32, %c0_i32_0 : i32, i32
  }
  func.func @transform_4(%arg0: i32) -> (i32, i32) {
    %c0_i32 = arith.constant 0 : i32
    %c0_i32_0 = arith.constant 0 : i32
    %c0_i32_1 = arith.constant 0 : i32
    return %c0_i32, %c0_i32_0 : i32, i32
  }
  func.func @transform_5(%arg0: i32) -> (i32, i32) {
    %c0_i32 = arith.constant 0 : i32
    %c0_i32_0 = arith.constant 0 : i32
    %c0_i32_1 = arith.constant 0 : i32
    return %c0_i32, %c0_i32_0 : i32, i32
  }
  func.func @transform_6(%arg0: i32) -> (i32, i32) {
    %c0_i32 = arith.constant 0 : i32
    %c0_i32_0 = arith.constant 0 : i32
    %c0_i32_1 = arith.constant 0 : i32
    return %c0_i32, %c0_i32_0 : i32, i32
  }
  func.func @transform_7(%arg0: i32) -> (i32, i32) {
    %c0_i32 = arith.constant 0 : i32
    %c0_i32_0 = arith.constant 0 : i32
    %c0_i32_1 = arith.constant 0 : i32
    return %c0_i32, %c0_i32_0 : i32, i32
  }
  func.func @transform_8(%arg0: i32) -> (i32, i32) {
    %c0_i32 = arith.constant 0 : i32
    %c0_i32_0 = arith.constant 0 : i32
    %c0_i32_1 = arith.constant 0 : i32
    return %c0_i32, %c0_i32_0 : i32, i32
  }
  func.func @transform_9(%arg0: i32) -> (i32, i32) {
    %c0_i32 = arith.constant 0 : i32
    %c0_i32_0 = arith.constant 0 : i32
    return %arg0, %c0_i32 : i32, i32
  }
}

</mosaic_0001>

<llo_original>
// kernel: tpu_custom_call.1
$region0: #{tpu_custom_call.1}
  #allocation0 [shape = 'u32[]', space=smem, size = 0x4, offset = 0x4, fixed_abs, tag = 'smem constant byte address 0x4 - core index']
  #allocation1 [shape = 'u32[144,128]{1,0:T(1,128)}', space=vmem, size = 0x12000, scoped, tag = 'internal scratch']
  %s0 = inlined_call_operand.hbm [shape: f32[16,128], index: 0, kind: input, shape index: {}]
  %s1 = inlined_call_operand.hbm [shape: f32[8,128], index: 1, kind: input, shape index: {}]
  %s2 = inlined_call_operand.hbm [shape: f32[16,128], index: 2, kind: output, shape index: {}]
  %s3 = sld [smem:[#allocation0]]
  $region49: #{tpu_custom_call.1} parent=0
    _
  %s5 = ssub.s32 1, %s3
  %s6 = scalar_select 0, %s5, %s3
  $region1: #{tpu_custom_call.1} parent=0
    #allocation2 [shape = 'u8[8192]{0}', space=vmem, size = 0x2000, scoped, tag = 'input window, operand 0']
    #allocation3 [shape = 's32[2]{0}', space=sflag, size = 0x8, scoped, tag = 'scoped memory for tpu_custom_call.1']
    #allocation4 [shape = 's32[2]{0}', space=sflag, size = 0x8, scoped, tag = 'scoped memory for tpu_custom_call.1']
    #allocation5 [shape = 'u8[4096]{0}', space=vmem, size = 0x1000, scoped, tag = 'input window, operand 1, single buffered']
    #allocation6 [shape = 's32[1]{0}', space=sflag, size = 0x4, scoped, tag = 'scoped memory for tpu_custom_call.1']
    #allocation7 [shape = 'u8[8192]{0}', space=vmem, size = 0x2000, scoped, tag = 'output window, operand 0']
    %7 = vsyncpa [#allocation3], 0
    %s8 = scalar_lea.sflag [#allocation3], 1
    %9 = vsyncpa %s8, 0
    %10 = vsyncpa [#allocation6], 0
    %11 = vsyncpa [#allocation4], 0
    %s12 = scalar_lea.sflag [#allocation4], 1
    %13 = vsyncpa %s12, 0
    loop: start=0, step=1, limit=4
    $region2: #{tpu_custom_call.1} parent=1 // loop_pre_header
      _
    $region3: #{tpu_custom_call.1} parent=1 // loop_header
      %s15 = sphi 0, %s19
      %p16 = scmp.ge.s32.totalorder %s15, 4
      %s25 = sphi 0, %s27
      %s28 = sphi 0, %s25
      %s29 = sphi 0, %s28
      %s45 = sphi 0, %s29
      %s49 = sphi 0, %s49
      %s51 = sphi 0, %s49
      %s52 = sphi 0, %s51
      %s66 = sphi 0, %s52
      %s72 = sphi 0, %s74
      %s75 = sphi 0, %s72
      %s76 = sphi 0, %s75
      %s92 = sphi 0, %s76
    $region4: #{tpu_custom_call.1} parent=1 // loop_header_branch
      %18 = sbr.rel (%p16) target = $region8
    $region5: #{tpu_custom_call.1} parent=1 // loop_body
      %s20 = ssub.s32 %s15, 1
      %s21 = ssub.s32 %s15, 2
      %s22 = sadd.s32 %s15, 1
      %s23 = ssub.s32 %s15, %s22
      %p24 = scmp.eq.s32.totalorder %s23, 0
      %s26 = sadd.s32 %s25, 1
      %s27 = scalar_select %p24, %s25, %s26
      %p30 = pneg %p24
      %p31 = scmp.eq.s32.totalorder %s15, 1
      %p32 = por %p30, %p31
      %p33 = scmp.ne.s32.totalorder %s25, %s28
      %p34 = scmp.eq.s32.totalorder %s15, 0
      %p35 = por %p33, %p34
      %p36 = scmp.ne.s32.totalorder %s25, %s28
      %p37 = scmp.eq.s32.totalorder %s20, 1
      %p38 = por %p36, %p37
      %p39 = scmp.ne.s32.totalorder %s28, %s29
      %p40 = scmp.eq.s32.totalorder %s20, 0
      %p41 = por %p39, %p40
      %p42 = scmp.ne.s32.totalorder %s28, %s29
      %p43 = scmp.eq.s32.totalorder %s21, 1
      %p44 = por %p42, %p43
      %p46 = scmp.ne.s32.totalorder %s29, %s45
      %p47 = scmp.eq.s32.totalorder %s21, 0
      %p48 = por %p46, %p47
      %s50 = sadd.s32 %s49, 1
      %p53 = scmp.eq.s32.totalorder %s15, 1
      %p54 = scmp.ne.s32.totalorder %s49, %s51
      %p55 = scmp.eq.s32.totalorder %s15, 0
      %p56 = por %p54, %p55
      %p57 = scmp.ne.s32.totalorder %s49, %s51
      %p58 = scmp.eq.s32.totalorder %s20, 1
      %p59 = por %p57, %p58
      %p60 = scmp.ne.s32.totalorder %s51, %s52
      %p61 = scmp.eq.s32.totalorder %s20, 0
      %p62 = por %p60, %p61
      %p63 = scmp.ne.s32.totalorder %s51, %s52
      %p64 = scmp.eq.s32.totalorder %s21, 1
      %p65 = por %p63, %p64
      %p67 = scmp.ne.s32.totalorder %s52, %s66
      %p68 = scmp.eq.s32.totalorder %s21, 0
      %p69 = por %p67, %p68
      %s70 = ssub.s32 %s15, %s22
      %p71 = scmp.eq.s32.totalorder %s70, 0
      %s73 = sadd.s32 %s72, 1
      %s74 = scalar_select %p71, %s72, %s73
      %p77 = pneg %p71
      %p78 = scmp.eq.s32.totalorder %s15, 1
      %p79 = por %p77, %p78
      %p80 = scmp.ne.s32.totalorder %s72, %s75
      %p81 = scmp.eq.s32.totalorder %s15, 0
      %p82 = por %p80, %p81
      %p83 = scmp.ne.s32.totalorder %s72, %s75
      %p84 = scmp.eq.s32.totalorder %s20, 1
      %p85 = por %p83, %p84
      %p86 = scmp.ne.s32.totalorder %s75, %s76
      %p87 = scmp.eq.s32.totalorder %s20, 0
      %p88 = por %p86, %p87
      %p89 = scmp.ne.s32.totalorder %s75, %s76
      %p90 = scmp.eq.s32.totalorder %s21, 1
      %p91 = por %p89, %p90
      %p93 = scmp.ne.s32.totalorder %s76, %s92
      %p94 = scmp.eq.s32.totalorder %s21, 0
      %p95 = por %p93, %p94
      %p96 = scmp.le.s32.totalorder 1, %s15
      %p97 = scmp.lt.s32.totalorder %s15, 3
      %p98 = pnand %p96, %p97
      %p99 = pneg %p98
      // Predicated region
      $region9: #{tpu_custom_call.1} parent=5 // pred_check
        _
      $region10: #{tpu_custom_call.1} parent=5 // pred_check_branch
        %101 = sbr.rel (%p98) target = $region12
      $region11: #{tpu_custom_call.1} parent=5 // pred_region
        %s102 = ssub.s32 %s15, 1
        // Predicated region
        $region13: #{tpu_custom_call.1} parent=11 // pred_check
          %p103 = pneg %p62
        $region14: #{tpu_custom_call.1} parent=11 // pred_check_branch
          %105 = sbr.rel (%p103) target = $region16
        $region15: #{tpu_custom_call.1} parent=11 // pred_region
          %s107 = ssub.s32 128, 128
          %108 = vsyncadd [#allocation6], %s107
          %s110 = sshll.u32 [#allocation5], 4
          %s111 = int_to_ptr.vmem [resolvable:$true] %s110
          %113 = dma.hbm_to_vmem [thread:$0]  %s1, 128, %s111, [#allocation6]
        $region16: #{tpu_custom_call.1} parent=11 // pred_fallthru
          _
      $region12: #{tpu_custom_call.1} parent=5 // pred_fallthru
        _
      %p114 = scmp.lt.s32.totalorder %s15, 2
      // Predicated region
      $region17: #{tpu_custom_call.1} parent=5 // pred_check
        %p115 = pneg %p114
      $region18: #{tpu_custom_call.1} parent=5 // pred_check_branch
        %117 = sbr.rel (%p115) target = $region20
      $region19: #{tpu_custom_call.1} parent=5 // pred_region
        // Predicated region
        $region21: #{tpu_custom_call.1} parent=19 // pred_check
          %p118 = pneg %p35
        $region22: #{tpu_custom_call.1} parent=19 // pred_check_branch
          %120 = sbr.rel (%p118) target = $region24
        $region23: #{tpu_custom_call.1} parent=19 // pred_region
          %s121 = sand.u32 %s25, 1
          %s122 = scalar_lea.sflag [#allocation3], %s121
          %s123 = sand.u32 %s25, 1
          %s124 = smul.addr %s123, 8
          %s125 = scalar_lea.vmem [#allocation2], %s124
          %s127 = ssub.s32 128, 128
          %128 = vsyncadd %s122, %s127
          %s129 = smul.addr %s15, 128
          %s130 = scalar_lea.hbm %s0, %s129
          %s132 = sshll.u32 %s125, 4
          %s133 = int_to_ptr.vmem [resolvable:$true] %s132
          %135 = dma.hbm_to_vmem [thread:$0]  %s130, 128, %s133, %s122
        $region24: #{tpu_custom_call.1} parent=19 // pred_fallthru
          _
      $region20: #{tpu_custom_call.1} parent=5 // pred_fallthru
        _
      %p136 = scmp.le.s32.totalorder 1, %s15
      %p137 = scmp.lt.s32.totalorder %s15, 3
      %p138 = pnand %p136, %p137
      %p139 = pneg %p138
      // Predicated region
      $region25: #{tpu_custom_call.1} parent=5 // pred_check
        _
      $region26: #{tpu_custom_call.1} parent=5 // pred_check_branch
        %141 = sbr.rel (%p138) target = $region28
      $region27: #{tpu_custom_call.1} parent=5 // pred_region
        %s142 = ssub.s32 %s15, 1
        %s143 = sand.u32 %s28, 1
        %s144 = scalar_lea.sflag [#allocation3], %s143
        %s145 = sand.u32 %s28, 1
        %s146 = smul.addr %s145, 8
        %s147 = scalar_lea.vmem [#allocation2], %s146
        // Predicated region
        $region29: #{tpu_custom_call.1} parent=27 // pred_check
          %p148 = pneg %p41
        $region30: #{tpu_custom_call.1} parent=27 // pred_check_branch
          %150 = sbr.rel (%p148) target = $region32
        $region31: #{tpu_custom_call.1} parent=27 // pred_region
          %151 = dma.done %s144, 128
        $region32: #{tpu_custom_call.1} parent=27 // pred_fallthru
          _
        // Predicated region
        $region33: #{tpu_custom_call.1} parent=27 // pred_check
          %p152 = pneg %p62
        $region34: #{tpu_custom_call.1} parent=27 // pred_check_branch
          %154 = sbr.rel (%p152) target = $region36
        $region35: #{tpu_custom_call.1} parent=27 // pred_region
          %155 = dma.done [#allocation6], 128
        $region36: #{tpu_custom_call.1} parent=27 // pred_fallthru
          _
        %s156 = sand.u32 %s28, 1
        %s157 = scalar_lea.sflag [#allocation3], %s156
        %s158 = sand.u32 %s28, 1
        %s159 = smul.addr %s158, 8
        %s160 = scalar_lea.vmem [#allocation2], %s159
        %p161 = pneg %p41
        %p162 = pneg %p38
        %p163 = pneg %p62
        %p164 = pneg %p59
        %p165 = pneg %p88
        %p166 = pneg %p85
        %s167 = sand.u32 %s75, 1
        %s168 = scalar_lea.sflag [#allocation4], %s167
        %s169 = sand.u32 %s75, 1
        %s170 = smul.addr %s169, 8
        %s171 = scalar_lea.vmem [#allocation7], %s170
        %v172 = vld [vmem:[%s147] sm:$0xff]
        %v173 = vld [vmem:[#allocation5] sm:$0xff]
        %v174 = vadd.f32 %v172, %v173
        %175 = vst [vmem:[%s171] sm:$0xff] %v174
        %s176 = sand.u32 %s75, 1
        %s177 = scalar_lea.sflag [#allocation4], %s176
        %s178 = sand.u32 %s75, 1
        %s179 = smul.addr %s178, 8
        %s180 = scalar_lea.vmem [#allocation7], %s179
        // Predicated region
        $region37: #{tpu_custom_call.1} parent=27 // pred_check
          %p181 = pneg %p85
        $region38: #{tpu_custom_call.1} parent=27 // pred_check_branch
          %183 = sbr.rel (%p181) target = $region40
        $region39: #{tpu_custom_call.1} parent=27 // pred_region
          %s185 = ssub.s32 128, 128
          %186 = vsyncadd %s177, %s185
          %s187 = smul.addr %s20, 128
          %s188 = scalar_lea.hbm %s2, %s187
          %s190 = sshll.u32 %s180, 4
          %s191 = int_to_ptr.vmem [resolvable:$true] %s190
          %193 = dma.vmem_to_hbm [thread:$0]  %s191, 128, %s188, %s177
        $region40: #{tpu_custom_call.1} parent=27 // pred_fallthru
          _
      $region28: #{tpu_custom_call.1} parent=5 // pred_fallthru
        _
      %p194 = scmp.le.s32.totalorder 2, %s15
      // Predicated region
      $region41: #{tpu_custom_call.1} parent=5 // pred_check
        %p195 = pneg %p194
      $region42: #{tpu_custom_call.1} parent=5 // pred_check_branch
        %197 = sbr.rel (%p195) target = $region44
      $region43: #{tpu_custom_call.1} parent=5 // pred_region
        %s198 = ssub.s32 %s15, 2
        // Predicated region
        $region45: #{tpu_custom_call.1} parent=43 // pred_check
          %p199 = pneg %p91
        $region46: #{tpu_custom_call.1} parent=43 // pred_check_branch
          %201 = sbr.rel (%p199) target = $region48
        $region47: #{tpu_custom_call.1} parent=43 // pred_region
          %s202 = sand.u32 %s76, 1
          %s203 = scalar_lea.sflag [#allocation4], %s202
          %s204 = sand.u32 %s76, 1
          %s205 = smul.addr %s204, 8
          %s206 = scalar_lea.vmem [#allocation7], %s205
          %207 = dma.done %s203, 128
        $region48: #{tpu_custom_call.1} parent=43 // pred_fallthru
          _
      $region44: #{tpu_custom_call.1} parent=5 // pred_fallthru
        _
    $region6: #{tpu_custom_call.1} parent=1 // loop_footer
      %s19 = sadd.s32 1, %s15
    $region7: #{tpu_custom_call.1} parent=1 // loop_footer_branch
      %14 = sbr.rel target = $region3
    $region8: #{tpu_custom_call.1} parent=1 // loop_exit
      _
    %208 = vsyncpa [#allocation3], 1
    %s209 = scalar_lea.sflag [#allocation3], 1
    %210 = vsyncpa %s209, 1
    %211 = vsyncpa [#allocation6], 1
    %212 = vsyncpa [#allocation4], 1
    %s213 = scalar_lea.sflag [#allocation4], 1
    %214 = vsyncpa %s213, 1

// kernel: forward.1
$region0: #{forward.1}
  #allocation0 [shape = 'u32[]', space=smem, size = 0x4, offset = 0x4, fixed_abs, tag = 'smem constant byte address 0x4 - core index']
  #allocation1 [shape = 'u32[144,128]{1,0:T(1,128)}', space=vmem, size = 0x12000, scoped, tag = 'internal scratch']
  %s0 = inlined_call_operand.vmem [shape: f32[16,128], index: 0, kind: input, shape index: {}]
  %s1 = inlined_call_operand.hbm [shape: bf16[128,128], index: 1, kind: input, shape index: {}]
  %s2 = inlined_call_operand.vmem [shape: f32[1,128], index: 2, kind: input, shape index: {}]
  %s3 = inlined_call_operand.hbm [shape: bf16[128,128], index: 3, kind: input, shape index: {}]
  %s4 = inlined_call_operand.vmem [shape: f32[1,128], index: 4, kind: input, shape index: {}]
  %s5 = inlined_call_operand.hbm [shape: bf16[128,128], index: 5, kind: input, shape index: {}]
  %s6 = inlined_call_operand.vmem [shape: f32[1,128], index: 6, kind: input, shape index: {}]
  %s7 = inlined_call_operand.hbm [shape: bf16[128,128], index: 7, kind: input, shape index: {}]
  %s8 = inlined_call_operand.vmem [shape: f32[1,128], index: 8, kind: input, shape index: {}]
  %s9 = inlined_call_operand.vmem [shape: f32[16,128], index: 9, kind: output, shape index: {}]
  %s10 = sld [smem:[#allocation0]]
  $region62: #{forward.1} parent=0
    _
  %s12 = ssub.s32 1, %s10
  %s13 = scalar_select 0, %s12, %s10
  $region1: #{forward.1} parent=0
    #allocation2 [shape = 'u8[32768]{0}', space=vmem, size = 0x8000, scoped, tag = 'input window, operand 1, single buffered']
    #allocation3 [shape = 's32[1]{0}', space=sflag, size = 0x4, scoped, tag = 'scoped memory for forward.1']
    #allocation4 [shape = 'u8[32768]{0}', space=vmem, size = 0x8000, scoped, tag = 'input window, operand 3, single buffered']
    #allocation5 [shape = 's32[1]{0}', space=sflag, size = 0x4, scoped, tag = 'scoped memory for forward.1']
    #allocation6 [shape = 'u8[32768]{0}', space=vmem, size = 0x8000, scoped, tag = 'input window, operand 5, single buffered']
    #allocation7 [shape = 'u8[32768]{0}', space=vmem, size = 0x8000, scoped, tag = 'input window, operand 7, single buffered']
    #allocation8 [shape = 's32[1]{0}', space=sflag, size = 0x4, scoped, tag = 'scoped memory for forward.1']
    %14 = vsyncpa [#allocation3], 0
    %15 = vsyncpa [#allocation5], 0
    %16 = vsyncpa [#allocation8], 0
    // Predicated region
    $region2: #{forward.1} parent=1 // pred_check
      _
    $region3: #{forward.1} parent=1 // pred_check_branch
      %18 = sbr.rel (0) target = $region5
    $region4: #{forward.1} parent=1 // pred_region
      _
    $region5: #{forward.1} parent=1 // pred_fallthru
      _
    // Predicated region
    $region6: #{forward.1} parent=1 // pred_check
      _
    $region7: #{forward.1} parent=1 // pred_check_branch
      %20 = sbr.rel (0) target = $region9
    $region8: #{forward.1} parent=1 // pred_region
      %s22 = ssub.s32 1024, 1024
      %23 = vsyncadd [#allocation3], %s22
      %s24 = sshll.u32 [#allocation2], 4
      %s25 = int_to_ptr.vmem [resolvable:$true] %s24
      %30 = dma.hbm_to_vmem [thread:$0]  %s1, 1024, %s25, [#allocation3], 64, 64, 4
    $region9: #{forward.1} parent=1 // pred_fallthru
      _
    // Predicated region
    $region10: #{forward.1} parent=1 // pred_check
      _
    $region11: #{forward.1} parent=1 // pred_check_branch
      %32 = sbr.rel (0) target = $region13
    $region12: #{forward.1} parent=1 // pred_region
      _
    $region13: #{forward.1} parent=1 // pred_fallthru
      _
    // Predicated region
    $region14: #{forward.1} parent=1 // pred_check
      _
    $region15: #{forward.1} parent=1 // pred_check_branch
      %34 = sbr.rel (0) target = $region17
    $region16: #{forward.1} parent=1 // pred_region
      %s36 = ssub.s32 1024, 1024
      %37 = vsyncadd [#allocation5], %s36
      %s38 = sshll.u32 [#allocation4], 4
      %s39 = int_to_ptr.vmem [resolvable:$true] %s38
      %44 = dma.hbm_to_vmem [thread:$0]  %s3, 1024, %s39, [#allocation5], 64, 64, 4
    $region17: #{forward.1} parent=1 // pred_fallthru
      _
    // Predicated region
    $region18: #{forward.1} parent=1 // pred_check
      _
    $region19: #{forward.1} parent=1 // pred_check_branch
      %46 = sbr.rel (0) target = $region21
    $region20: #{forward.1} parent=1 // pred_region
      _
    $region21: #{forward.1} parent=1 // pred_fallthru
      _
    // Predicated region
    $region22: #{forward.1} parent=1 // pred_check
      _
    $region23: #{forward.1} parent=1 // pred_check_branch
      %48 = sbr.rel (0) target = $region25
    $region24: #{forward.1} parent=1 // pred_region
      %s50 = ssub.s32 1024, 1024
      %51 = vsyncadd [#allocation5], %s50
      %s52 = sshll.u32 [#allocation6], 4
      %s53 = int_to_ptr.vmem [resolvable:$true] %s52
      %58 = dma.hbm_to_vmem [thread:$0]  %s5, 1024, %s53, [#allocation5], 64, 64, 4
    $region25: #{forward.1} parent=1 // pred_fallthru
      _
    // Predicated region
    $region26: #{forward.1} parent=1 // pred_check
      _
    $region27: #{forward.1} parent=1 // pred_check_branch
      %60 = sbr.rel (0) target = $region29
    $region28: #{forward.1} parent=1 // pred_region
      _
    $region29: #{forward.1} parent=1 // pred_fallthru
      _
    // Predicated region
    $region30: #{forward.1} parent=1 // pred_check
      _
    $region31: #{forward.1} parent=1 // pred_check_branch
      %62 = sbr.rel (0) target = $region33
    $region32: #{forward.1} parent=1 // pred_region
      %s64 = ssub.s32 1024, 1024
      %65 = vsyncadd [#allocation8], %s64
      %s66 = sshll.u32 [#allocation7], 4
      %s67 = int_to_ptr.vmem [resolvable:$true] %s66
      %72 = dma.hbm_to_vmem [thread:$0]  %s7, 1024, %s67, [#allocation8], 64, 64, 4
    $region33: #{forward.1} parent=1 // pred_fallthru
      _
    // Predicated region
    $region34: #{forward.1} parent=1 // pred_check
      _
    $region35: #{forward.1} parent=1 // pred_check_branch
      %74 = sbr.rel (0) target = $region37
    $region36: #{forward.1} parent=1 // pred_region
      _
    $region37: #{forward.1} parent=1 // pred_fallthru
      _
    // Predicated region
    $region38: #{forward.1} parent=1 // pred_check
      _
    $region39: #{forward.1} parent=1 // pred_check_branch
      %76 = sbr.rel (0) target = $region41
    $region40: #{forward.1} parent=1 // pred_region
      %77 = dma.done [#allocation3], 1024
    $region41: #{forward.1} parent=1 // pred_fallthru
      _
    // Predicated region
    $region42: #{forward.1} parent=1 // pred_check
      _
    $region43: #{forward.1} parent=1 // pred_check_branch
      %79 = sbr.rel (0) target = $region45
    $region44: #{forward.1} parent=1 // pred_region
      %80 = dma.done [#allocation5], 1024
    $region45: #{forward.1} parent=1 // pred_fallthru
      _
    // Predicated region
    $region46: #{forward.1} parent=1 // pred_check
      _
    $region47: #{forward.1} parent=1 // pred_check_branch
      %82 = sbr.rel (0) target = $region49
    $region48: #{forward.1} parent=1 // pred_region
      %83 = dma.done [#allocation5], 1024
    $region49: #{forward.1} parent=1 // pred_fallthru
      _
    // Predicated region
    $region50: #{forward.1} parent=1 // pred_check
      _
    $region51: #{forward.1} parent=1 // pred_check_branch
      %85 = sbr.rel (0) target = $region53
    $region52: #{forward.1} parent=1 // pred_region
      %86 = dma.done [#allocation8], 1024
    $region53: #{forward.1} parent=1 // pred_fallthru
      _
    %v88 = vld [vmem:[%s0] sm:$0xff]
    %v89 = vld [vmem:[%s0 + $0x8] sm:$0xff]
    %v90 = vpack.c.bf16 %v89, %v88
    %v91 = vld [vmem:[#allocation2] sm:$0xf]
    %v92 = vld [vmem:[#allocation2 + $0x4] sm:$0xf]
    %v93 = vld [vmem:[#allocation2 + $0x8] sm:$0xf]
    %v94 = vld [vmem:[#allocation2 + $0xc] sm:$0xf]
    %v95 = vld [vmem:[#allocation2 + $0x10] sm:$0xf]
    %v96 = vld [vmem:[#allocation2 + $0x14] sm:$0xf]
    %v97 = vld [vmem:[#allocation2 + $0x18] sm:$0xf]
    %v98 = vld [vmem:[#allocation2 + $0x1c] sm:$0xf]
    %v99 = vld [vmem:[#allocation2 + $0x20] sm:$0xf]
    %v100 = vld [vmem:[#allocation2 + $0x24] sm:$0xf]
    %v101 = vld [vmem:[#allocation2 + $0x28] sm:$0xf]
    %v102 = vld [vmem:[#allocation2 + $0x2c] sm:$0xf]
    %v103 = vld [vmem:[#allocation2 + $0x30] sm:$0xf]
    %v104 = vld [vmem:[#allocation2 + $0x34] sm:$0xf]
    %v105 = vld [vmem:[#allocation2 + $0x38] sm:$0xf]
    %v106 = vld [vmem:[#allocation2 + $0x3c] sm:$0xf]
    %v107 = vld [vmem:[%s2] sm:$0x1]
    %v109 = vlaneseq
    %v110 = vshrl.u32 %v109, 7
    %v111 = vsub.s32 0, %v110
    %v112 = vrot.slane %v107, %v111
    %v130 = vunpack.c.l.b16 %v91
    %v131 = vunpack.c.l.b16 %v92
    %v132 = vunpack.c.l.b16 %v93
    %v133 = vunpack.c.l.b16 %v94
    %v134 = vunpack.c.l.b16 %v95
    %v135 = vunpack.c.l.b16 %v96
    %v136 = vunpack.c.l.b16 %v97
    %v137 = vunpack.c.l.b16 %v98
    %v138 = vunpack.c.l.b16 %v99
    %v139 = vunpack.c.l.b16 %v100
    %v140 = vunpack.c.l.b16 %v101
    %v141 = vunpack.c.l.b16 %v102
    %v142 = vunpack.c.l.b16 %v103
    %v143 = vunpack.c.l.b16 %v104
    %v144 = vunpack.c.l.b16 %v105
    %v145 = vunpack.c.l.b16 %v106
    %v146 = vpack.c.b16 %v131, %v130
    %v147 = vpack.c.b16 %v133, %v132
    %v148 = vpack.c.b16 %v135, %v134
    %v149 = vpack.c.b16 %v137, %v136
    %v150 = vpack.c.b16 %v139, %v138
    %v151 = vpack.c.b16 %v141, %v140
    %v152 = vpack.c.b16 %v143, %v142
    %v153 = vpack.c.b16 %v145, %v144
    %162 = vmatprep.subr.bf16.mxu0 0
    %163 = vmatpush1.bf16.msra.mxu0 %v146
    %164 = vmatprep.subr.bf16.mxu0 0
    %165 = vmatpush1.bf16.msra.mxu0 %v147
    %166 = vmatprep.subr.bf16.mxu0 0
    %167 = vmatpush1.bf16.msra.mxu0 %v148
    %168 = vmatprep.subr.bf16.mxu0 0
    %169 = vmatpush1.bf16.msra.mxu0 %v149
    %170 = vmatprep.subr.bf16.mxu0 0
    %171 = vmatpush1.bf16.msra.mxu0 %v150
    %172 = vmatprep.subr.bf16.mxu0 0
    %173 = vmatpush1.bf16.msra.mxu0 %v151
    %174 = vmatprep.subr.bf16.mxu0 0
    %175 = vmatpush1.bf16.msra.mxu0 %v152
    %176 = vmatprep.subr.bf16.mxu0 0
    %177 = vmatpush1.bf16.msra.mxu0 %v153
    %178 = vmatprep.subr.bf16.mxu0 0
    %179 = vmatpush1.bf16.msra.mxu0 0
    %180 = vmatprep.subr.bf16.mxu0 0
    %181 = vmatpush1.bf16.msra.mxu0 0
    %182 = vmatprep.subr.bf16.mxu0 0
    %183 = vmatpush1.bf16.msra.mxu0 0
    %184 = vmatprep.subr.bf16.mxu0 0
    %185 = vmatpush1.bf16.msra.mxu0 0
    %186 = vmatprep.subr.bf16.mxu0 0
    %187 = vmatpush1.bf16.msra.mxu0 0
    %188 = vmatprep.subr.bf16.mxu0 0
    %189 = vmatpush1.bf16.msra.mxu0 0
    %190 = vmatprep.subr.bf16.mxu0 0
    %191 = vmatpush1.bf16.msra.mxu0 0
    %192 = vmatprep.subr.bf16.mxu0 0
    %193 = vmatpush1.bf16.msra.mxu0 0
    %194 = vmatprep.mubr.bf16.mxu0 0
    %195 = vmatmul.mubr.bf16.gmra.mrb[0].mxu0 %v90
    %v196 = vpop.f32.mrb[0].mxu0
    %v197 = vadd.f32 %v112, %v196
    %v198 = vpop.f32.mrb[0].mxu0
    %v199 = vpop.f32.mrb[0].mxu0
    %v200 = vadd.f32 %v112, %v199
    %v201 = vpop.f32.mrb[0].mxu0
    %202 = vdwg.mxu0
    %v203 = vmax.f32 %v197, 0.0
    %v204 = vmax.f32 %v200, 0.0
    %v205 = vpack.c.bf16 %v204, %v203
    %v206 = vld [vmem:[#allocation4] sm:$0xf]
    %v207 = vld [vmem:[#allocation4 + $0x4] sm:$0xf]
    %v208 = vld [vmem:[#allocation4 + $0x8] sm:$0xf]
    %v209 = vld [vmem:[#allocation4 + $0xc] sm:$0xf]
    %v210 = vld [vmem:[#allocation4 + $0x10] sm:$0xf]
    %v211 = vld [vmem:[#allocation4 + $0x14] sm:$0xf]
    %v212 = vld [vmem:[#allocation4 + $0x18] sm:$0xf]
    %v213 = vld [vmem:[#allocation4 + $0x1c] sm:$0xf]
    %v214 = vld [vmem:[#allocation4 + $0x20] sm:$0xf]
    %v215 = vld [vmem:[#allocation4 + $0x24] sm:$0xf]
    %v216 = vld [vmem:[#allocation4 + $0x28] sm:$0xf]
    %v217 = vld [vmem:[#allocation4 + $0x2c] sm:$0xf]
    %v218 = vld [vmem:[#allocation4 + $0x30] sm:$0xf]
    %v219 = vld [vmem:[#allocation4 + $0x34] sm:$0xf]
    %v220 = vld [vmem:[#allocation4 + $0x38] sm:$0xf]
    %v221 = vld [vmem:[#allocation4 + $0x3c] sm:$0xf]
    %v222 = vld [vmem:[%s4] sm:$0x1]
    %v224 = vlaneseq
    %v225 = vshrl.u32 %v224, 7
    %v226 = vsub.s32 0, %v225
    %v227 = vrot.slane %v222, %v226
    %v245 = vunpack.c.l.b16 %v206
    %v246 = vunpack.c.l.b16 %v207
    %v247 = vunpack.c.l.b16 %v208
    %v248 = vunpack.c.l.b16 %v209
    %v249 = vunpack.c.l.b16 %v210
    %v250 = vunpack.c.l.b16 %v211
    %v251 = vunpack.c.l.b16 %v212
    %v252 = vunpack.c.l.b16 %v213
    %v253 = vunpack.c.l.b16 %v214
    %v254 = vunpack.c.l.b16 %v215
    %v255 = vunpack.c.l.b16 %v216
    %v256 = vunpack.c.l.b16 %v217
    %v257 = vunpack.c.l.b16 %v218
    %v258 = vunpack.c.l.b16 %v219
    %v259 = vunpack.c.l.b16 %v220
    %v260 = vunpack.c.l.b16 %v221
    %v261 = vpack.c.b16 %v246, %v245
    %v262 = vpack.c.b16 %v248, %v247
    %v263 = vpack.c.b16 %v250, %v249
    %v264 = vpack.c.b16 %v252, %v251
    %v265 = vpack.c.b16 %v254, %v253
    %v266 = vpack.c.b16 %v256, %v255
    %v267 = vpack.c.b16 %v258, %v257
    %v268 = vpack.c.b16 %v260, %v259
    %277 = vmatprep.subr.bf16.mxu0 0
    %278 = vmatpush1.bf16.msra.mxu0 %v261
    %279 = vmatprep.subr.bf16.mxu0 0
    %280 = vmatpush1.bf16.msra.mxu0 %v262
    %281 = vmatprep.subr.bf16.mxu0 0
    %282 = vmatpush1.bf16.msra.mxu0 %v263
    %283 = vmatprep.subr.bf16.mxu0 0
    %284 = vmatpush1.bf16.msra.mxu0 %v264
    %285 = vmatprep.subr.bf16.mxu0 0
    %286 = vmatpush1.bf16.msra.mxu0 %v265
    %287 = vmatprep.subr.bf16.mxu0 0
    %288 = vmatpush1.bf16.msra.mxu0 %v266
    %289 = vmatprep.subr.bf16.mxu0 0
    %290 = vmatpush1.bf16.msra.mxu0 %v267
    %291 = vmatprep.subr.bf16.mxu0 0
    %292 = vmatpush1.bf16.msra.mxu0 %v268
    %293 = vmatprep.subr.bf16.mxu0 0
    %294 = vmatpush1.bf16.msra.mxu0 0
    %295 = vmatprep.subr.bf16.mxu0 0
    %296 = vmatpush1.bf16.msra.mxu0 0
    %297 = vmatprep.subr.bf16.mxu0 0
    %298 = vmatpush1.bf16.msra.mxu0 0
    %299 = vmatprep.subr.bf16.mxu0 0
    %300 = vmatpush1.bf16.msra.mxu0 0
    %301 = vmatprep.subr.bf16.mxu0 0
    %302 = vmatpush1.bf16.msra.mxu0 0
    %303 = vmatprep.subr.bf16.mxu0 0
    %304 = vmatpush1.bf16.msra.mxu0 0
    %305 = vmatprep.subr.bf16.mxu0 0
    %306 = vmatpush1.bf16.msra.mxu0 0
    %307 = vmatprep.subr.bf16.mxu0 0
    %308 = vmatpush1.bf16.msra.mxu0 0
    %309 = vmatprep.mubr.bf16.mxu0 0
    %310 = vmatmul.mubr.bf16.gmra.mrb[0].mxu0 %v205
    %v311 = vpop.f32.mrb[0].mxu0
    %v312 = vadd.f32 %v227, %v311
    %v313 = vpop.f32.mrb[0].mxu0
    %v314 = vpop.f32.mrb[0].mxu0
    %v315 = vadd.f32 %v227, %v314
    %v316 = vpop.f32.mrb[0].mxu0
    %317 = vdwg.mxu0
    %v318 = vmax.f32 %v312, 0.0
    %v319 = vmax.f32 %v315, 0.0
    %v320 = vpack.c.bf16 %v319, %v318
    %v321 = vld [vmem:[#allocation6] sm:$0xf]
    %v322 = vld [vmem:[#allocation6 + $0x4] sm:$0xf]
    %v323 = vld [vmem:[#allocation6 + $0x8] sm:$0xf]
    %v324 = vld [vmem:[#allocation6 + $0xc] sm:$0xf]
    %v325 = vld [vmem:[#allocation6 + $0x10] sm:$0xf]
    %v326 = vld [vmem:[#allocation6 + $0x14] sm:$0xf]
    %v327 = vld [vmem:[#allocation6 + $0x18] sm:$0xf]
    %v328 = vld [vmem:[#allocation6 + $0x1c] sm:$0xf]
    %v329 = vld [vmem:[#allocation6 + $0x20] sm:$0xf]
    %v330 = vld [vmem:[#allocation6 + $0x24] sm:$0xf]
    %v331 = vld [vmem:[#allocation6 + $0x28] sm:$0xf]
    %v332 = vld [vmem:[#allocation6 + $0x2c] sm:$0xf]
    %v333 = vld [vmem:[#allocation6 + $0x30] sm:$0xf]
    %v334 = vld [vmem:[#allocation6 + $0x34] sm:$0xf]
    %v335 = vld [vmem:[#allocation6 + $0x38] sm:$0xf]
    %v336 = vld [vmem:[#allocation6 + $0x3c] sm:$0xf]
    %v337 = vld [vmem:[%s6] sm:$0x1]
    %v339 = vlaneseq
    %v340 = vshrl.u32 %v339, 7
    %v341 = vsub.s32 0, %v340
    %v342 = vrot.slane %v337, %v341
    %v360 = vunpack.c.l.b16 %v321
    %v361 = vunpack.c.l.b16 %v322
    %v362 = vunpack.c.l.b16 %v323
    %v363 = vunpack.c.l.b16 %v324
    %v364 = vunpack.c.l.b16 %v325
    %v365 = vunpack.c.l.b16 %v326
    %v366 = vunpack.c.l.b16 %v327
    %v367 = vunpack.c.l.b16 %v328
    %v368 = vunpack.c.l.b16 %v329
    %v369 = vunpack.c.l.b16 %v330
    %v370 = vunpack.c.l.b16 %v331
    %v371 = vunpack.c.l.b16 %v332
    %v372 = vunpack.c.l.b16 %v333
    %v373 = vunpack.c.l.b16 %v334
    %v374 = vunpack.c.l.b16 %v335
    %v375 = vunpack.c.l.b16 %v336
    %v376 = vpack.c.b16 %v361, %v360
    %v377 = vpack.c.b16 %v363, %v362
    %v378 = vpack.c.b16 %v365, %v364
    %v379 = vpack.c.b16 %v367, %v366
    %v380 = vpack.c.b16 %v369, %v368
    %v381 = vpack.c.b16 %v371, %v370
    %v382 = vpack.c.b16 %v373, %v372
    %v383 = vpack.c.b16 %v375, %v374
    %392 = vmatprep.subr.bf16.mxu0 0
    %393 = vmatpush1.bf16.msra.mxu0 %v376
    %394 = vmatprep.subr.bf16.mxu0 0
    %395 = vmatpush1.bf16.msra.mxu0 %v377
    %396 = vmatprep.subr.bf16.mxu0 0
    %397 = vmatpush1.bf16.msra.mxu0 %v378
    %398 = vmatprep.subr.bf16.mxu0 0
    %399 = vmatpush1.bf16.msra.mxu0 %v379
    %400 = vmatprep.subr.bf16.mxu0 0
    %401 = vmatpush1.bf16.msra.mxu0 %v380
    %402 = vmatprep.subr.bf16.mxu0 0
    %403 = vmatpush1.bf16.msra.mxu0 %v381
    %404 = vmatprep.subr.bf16.mxu0 0
    %405 = vmatpush1.bf16.msra.mxu0 %v382
    %406 = vmatprep.subr.bf16.mxu0 0
    %407 = vmatpush1.bf16.msra.mxu0 %v383
    %408 = vmatprep.subr.bf16.mxu0 0
    %409 = vmatpush1.bf16.msra.mxu0 0
    %410 = vmatprep.subr.bf16.mxu0 0
    %411 = vmatpush1.bf16.msra.mxu0 0
    %412 = vmatprep.subr.bf16.mxu0 0
    %413 = vmatpush1.bf16.msra.mxu0 0
    %414 = vmatprep.subr.bf16.mxu0 0
    %415 = vmatpush1.bf16.msra.mxu0 0
    %416 = vmatprep.subr.bf16.mxu0 0
    %417 = vmatpush1.bf16.msra.mxu0 0
    %418 = vmatprep.subr.bf16.mxu0 0
    %419 = vmatpush1.bf16.msra.mxu0 0
    %420 = vmatprep.subr.bf16.mxu0 0
    %421 = vmatpush1.bf16.msra.mxu0 0
    %422 = vmatprep.subr.bf16.mxu0 0
    %423 = vmatpush1.bf16.msra.mxu0 0
    %424 = vmatprep.mubr.bf16.mxu0 0
    %425 = vmatmul.mubr.bf16.gmra.mrb[0].mxu0 %v320
    %v426 = vpop.f32.mrb[0].mxu0
    %v427 = vadd.f32 %v342, %v426
    %v428 = vpop.f32.mrb[0].mxu0
    %v429 = vpop.f32.mrb[0].mxu0
    %v430 = vadd.f32 %v342, %v429
    %v431 = vpop.f32.mrb[0].mxu0
    %432 = vdwg.mxu0
    %v433 = vmax.f32 %v427, 0.0
    %v434 = vmax.f32 %v430, 0.0
    %v435 = vpack.c.bf16 %v434, %v433
    %v436 = vld [vmem:[#allocation7] sm:$0xf]
    %v437 = vld [vmem:[#allocation7 + $0x4] sm:$0xf]
    %v438 = vld [vmem:[#allocation7 + $0x8] sm:$0xf]
    %v439 = vld [vmem:[#allocation7 + $0xc] sm:$0xf]
    %v440 = vld [vmem:[#allocation7 + $0x10] sm:$0xf]
    %v441 = vld [vmem:[#allocation7 + $0x14] sm:$0xf]
    %v442 = vld [vmem:[#allocation7 + $0x18] sm:$0xf]
    %v443 = vld [vmem:[#allocation7 + $0x1c] sm:$0xf]
    %v444 = vld [vmem:[#allocation7 + $0x20] sm:$0xf]
    %v445 = vld [vmem:[#allocation7 + $0x24] sm:$0xf]
    %v446 = vld [vmem:[#allocation7 + $0x28] sm:$0xf]
    %v447 = vld [vmem:[#allocation7 + $0x2c] sm:$0xf]
    %v448 = vld [vmem:[#allocation7 + $0x30] sm:$0xf]
    %v449 = vld [vmem:[#allocation7 + $0x34] sm:$0xf]
    %v450 = vld [vmem:[#allocation7 + $0x38] sm:$0xf]
    %v451 = vld [vmem:[#allocation7 + $0x3c] sm:$0xf]
    %v452 = vld [vmem:[%s8] sm:$0x1]
    %v454 = vlaneseq
    %v455 = vshrl.u32 %v454, 7
    %v456 = vsub.s32 0, %v455
    %v457 = vrot.slane %v452, %v456
    %v475 = vunpack.c.l.b16 %v436
    %v476 = vunpack.c.l.b16 %v437
    %v477 = vunpack.c.l.b16 %v438
    %v478 = vunpack.c.l.b16 %v439
    %v479 = vunpack.c.l.b16 %v440
    %v480 = vunpack.c.l.b16 %v441
    %v481 = vunpack.c.l.b16 %v442
    %v482 = vunpack.c.l.b16 %v443
    %v483 = vunpack.c.l.b16 %v444
    %v484 = vunpack.c.l.b16 %v445
    %v485 = vunpack.c.l.b16 %v446
    %v486 = vunpack.c.l.b16 %v447
    %v487 = vunpack.c.l.b16 %v448
    %v488 = vunpack.c.l.b16 %v449
    %v489 = vunpack.c.l.b16 %v450
    %v490 = vunpack.c.l.b16 %v451
    %v491 = vpack.c.b16 %v476, %v475
    %v492 = vpack.c.b16 %v478, %v477
    %v493 = vpack.c.b16 %v480, %v479
    %v494 = vpack.c.b16 %v482, %v481
    %v495 = vpack.c.b16 %v484, %v483
    %v496 = vpack.c.b16 %v486, %v485
    %v497 = vpack.c.b16 %v488, %v487
    %v498 = vpack.c.b16 %v490, %v489
    %507 = vmatprep.subr.bf16.mxu0 0
    %508 = vmatpush1.bf16.msra.mxu0 %v491
    %509 = vmatprep.subr.bf16.mxu0 0
    %510 = vmatpush1.bf16.msra.mxu0 %v492
    %511 = vmatprep.subr.bf16.mxu0 0
    %512 = vmatpush1.bf16.msra.mxu0 %v493
    %513 = vmatprep.subr.bf16.mxu0 0
    %514 = vmatpush1.bf16.msra.mxu0 %v494
    %515 = vmatprep.subr.bf16.mxu0 0
    %516 = vmatpush1.bf16.msra.mxu0 %v495
    %517 = vmatprep.subr.bf16.mxu0 0
    %518 = vmatpush1.bf16.msra.mxu0 %v496
    %519 = vmatprep.subr.bf16.mxu0 0
    %520 = vmatpush1.bf16.msra.mxu0 %v497
    %521 = vmatprep.subr.bf16.mxu0 0
    %522 = vmatpush1.bf16.msra.mxu0 %v498
    %523 = vmatprep.subr.bf16.mxu0 0
    %524 = vmatpush1.bf16.msra.mxu0 0
    %525 = vmatprep.subr.bf16.mxu0 0
    %526 = vmatpush1.bf16.msra.mxu0 0
    %527 = vmatprep.subr.bf16.mxu0 0
    %528 = vmatpush1.bf16.msra.mxu0 0
    %529 = vmatprep.subr.bf16.mxu0 0
    %530 = vmatpush1.bf16.msra.mxu0 0
    %531 = vmatprep.subr.bf16.mxu0 0
    %532 = vmatpush1.bf16.msra.mxu0 0
    %533 = vmatprep.subr.bf16.mxu0 0
    %534 = vmatpush1.bf16.msra.mxu0 0
    %535 = vmatprep.subr.bf16.mxu0 0
    %536 = vmatpush1.bf16.msra.mxu0 0
    %537 = vmatprep.subr.bf16.mxu0 0
    %538 = vmatpush1.bf16.msra.mxu0 0
    %539 = vmatprep.mubr.bf16.mxu0 0
    %540 = vmatmul.mubr.bf16.gmra.mrb[0].mxu0 %v435
    %v541 = vpop.f32.mrb[0].mxu0
    %v542 = vadd.f32 %v457, %v541
    %v543 = vpop.f32.mrb[0].mxu0
    %v544 = vpop.f32.mrb[0].mxu0
    %v545 = vadd.f32 %v457, %v544
    %v546 = vpop.f32.mrb[0].mxu0
    %547 = vdwg.mxu0
    %548 = vst [vmem:[%s9] sm:$0xff] %v542
    %549 = vst [vmem:[%s9 + $0x8] sm:$0xff] %v545
    // Predicated region
    $region54: #{forward.1} parent=1 // pred_check
      _
    $region55: #{forward.1} parent=1 // pred_check_branch
      %551 = sbr.rel (0) target = $region57
    $region56: #{forward.1} parent=1 // pred_region
      _
    $region57: #{forward.1} parent=1 // pred_fallthru
      _
    // Predicated region
    $region58: #{forward.1} parent=1 // pred_check
      _
    $region59: #{forward.1} parent=1 // pred_check_branch
      %553 = sbr.rel (0) target = $region61
    $region60: #{forward.1} parent=1 // pred_region
      _
    $region61: #{forward.1} parent=1 // pred_fallthru
      _
    %554 = vsyncpa [#allocation3], 1
    %555 = vsyncpa [#allocation5], 1
    %556 = vsyncpa [#allocation8], 1

</llo_original>
